<compile_context>
chip_gen: v7x
topology: tpu7x:2x2x1
jax: 0.10.0
libtpu: 0.0.40
codegen_flags: <defaults>
</compile_context>

<pallas_src>
import functools

import jax
import jax.numpy as jnp
from jax import lax
from jax.experimental import pallas as pl
from jax.experimental.pallas import tpu as pltpu


TARGET_TILE_BYTES = 4 << 20   # ~4 MiB streaming tiles
MIN_SPLIT_BYTES = 1 << 20     # don't force a multi-step grid on tiny arrays
MIN_GRID_STEPS = 4            # >= 4 steps so v7x's 2 TensorCores both stream
VMEM_LIMIT_BYTES = 32 << 20   # 4 MiB * (in+out) * double-buffer = 16 MiB resident


def _softplus_f32(x):
    # Numerically stable softplus, matches torch.nn.functional.softplus (beta=1).
    return jnp.maximum(x, 0.0) + jnp.log1p(jnp.exp(-jnp.abs(x)))


def _round8_up(v):
    return ((v + 7) // 8) * 8


def _pick_tile_rows(total_rows, row_bytes):
    """Row-tile size: ~4 MiB, multiple of 8 (or the full extent), and at least
    MIN_GRID_STEPS grid steps for anything big enough that megacore matters."""
    cap = max(8, (TARGET_TILE_BYTES // max(1, row_bytes)) // 8 * 8)
    if total_rows * row_bytes > MIN_SPLIT_BYTES:
        per_step = max(8, _round8_up(-(-total_rows // MIN_GRID_STEPS)))
        cap = min(cap, per_step)
    return total_rows if total_rows <= cap else cap


def _splitdim_lane_dense_kernel(spv_ref, x_ref, o_ref, *, col, d, tile_r, lane_only):
    """Lane-dense path: x viewed as [tile_r, 128] slab of the flattened array."""
    x = x_ref[...]                                   # [tile_r, 128] block in VMEM
    spv = spv_ref[0]                                 # precomputed softplus(var), f32
    transformed = (_softplus_f32(x.astype(jnp.float32)) + spv).astype(x.dtype)

    lane = lax.broadcasted_iota(jnp.int32, (1, 128), dimension=1)
    if lane_only:
        # d divides 128 (hence power of two): flat % d == lane % d == lane & (d-1).
        mask = (lane & (d - 1)) == col               # (1,128), sublane-broadcasts
    else:
        # General D: mask on the flat element index of the original [N, D] array.
        row = lax.broadcasted_iota(jnp.int32, (tile_r, 1), dimension=0)
        flat = (pl.program_id(0) * tile_r + row) * 128 + lane
        if (d & (d - 1)) == 0:
            mask = (flat & (d - 1)) == col
        else:
            mask = (flat % d) == col
    # Padding rows/lanes of a partial last block also run exp/log; that is
    # benign on TPU and their writes are discarded.
    o_ref[...] = jnp.where(mask, transformed, x)


def _splitdim_rows_kernel(spv_ref, x_ref, o_ref, *, col):
    """Row-tiled path: x blocked as [tile_n, W]; column = lane == col."""
    x = x_ref[...]                                   # [tile_n, W] block in VMEM
    spv = spv_ref[0]
    transformed = (_softplus_f32(x.astype(jnp.float32)) + spv).astype(x.dtype)
    lane = lax.broadcasted_iota(jnp.int32, (1, x.shape[1]), dimension=1)
    o_ref[...] = jnp.where(lane == col, transformed, x)


def splitdim_forward(x, var, *, col=1, donate_x=False):
    """x: [N, D] float array, var: [1] float array (the learned correction).

    donate_x=True enables the column-chunk-only path for wide D; it aliases x
    to the output, so the caller must not read x afterwards (use jax.jit with
    donate_argnums, as in the test below).
    """
    n, d = x.shape
    if not (0 <= col < d):
        raise ValueError(f"col={col} out of range for D={d}")

    # Hoisted scalar: softplus(var) computed once, outside the kernel / grid.
    sp_var = _softplus_f32(var.astype(jnp.float32))  # shape (1,), f32 -> SMEM

    itemsize = jnp.dtype(x.dtype).itemsize
    compiler_params = pltpu.CompilerParams(
        dimension_semantics=("parallel",),
        vmem_limit_bytes=VMEM_LIMIT_BYTES,
    )

    # ---- Path A: donated x, wide D -> only touch the 128-lane chunk with col.
    if donate_x and d >= 256:
        chunk = 128
        chunk_block = col // chunk
        tile_n = _pick_tile_rows(n, chunk * itemsize)
        grid = (pl.cdiv(n, tile_n),)
        return pl.pallas_call(
            functools.partial(_splitdim_rows_kernel, col=col % chunk),
            out_shape=jax.ShapeDtypeStruct((n, d), x.dtype),
            grid=grid,
            in_specs=[
                pl.BlockSpec(memory_space=pltpu.MemorySpace.SMEM),   # softplus(var)
                pl.BlockSpec((tile_n, chunk), lambda i: (i, chunk_block)),
            ],
            out_specs=pl.BlockSpec((tile_n, chunk), lambda i: (i, chunk_block)),
            input_output_aliases={1: 0},                              # x -> out
            compiler_params=compiler_params,
        )(sp_var, x)

    # ---- Path B: lane-dense view [N*D/128, 128] whenever (N*D) % 128 == 0.
    if (n * d) % 128 == 0:
        r = (n * d) // 128
        tile_r = _pick_tile_rows(r, 128 * itemsize)
        grid = (pl.cdiv(r, tile_r),)
        lane_only = (d <= 128) and (128 % d == 0)
        xr = x.reshape(r, 128)
        out = pl.pallas_call(
            functools.partial(_splitdim_lane_dense_kernel,
                              col=col, d=d, tile_r=tile_r, lane_only=lane_only),
            out_shape=jax.ShapeDtypeStruct((r, 128), x.dtype),
            grid=grid,
            in_specs=[
                pl.BlockSpec(memory_space=pltpu.MemorySpace.SMEM),   # softplus(var)
                pl.BlockSpec((tile_r, 128), lambda i: (i, 0)),       # x (flat rows)
            ],
            out_specs=pl.BlockSpec((tile_r, 128), lambda i: (i, 0)),
            compiler_params=compiler_params,
        )(sp_var, xr)
        return out.reshape(n, d)

    # ---- Path C: fallback, row tiles over the full (possibly lane-sparse) D.
    tile_n = _pick_tile_rows(n, d * itemsize)
    grid = (pl.cdiv(n, tile_n),)
    return pl.pallas_call(
        functools.partial(_splitdim_rows_kernel, col=col),
        out_shape=jax.ShapeDtypeStruct((n, d), x.dtype),
        grid=grid,
        in_specs=[
            pl.BlockSpec(memory_space=pltpu.MemorySpace.SMEM),       # softplus(var)
            pl.BlockSpec((tile_n, d), lambda i: (i, 0)),             # x (tiled rows)
        ],
        out_specs=pl.BlockSpec((tile_n, d), lambda i: (i, 0)),
        compiler_params=compiler_params,
    )(sp_var, x)


def splitdim_reference(x, var, *, col=1):
    """Pure-JAX reference mirroring the PyTorch forward (cat of slices)."""
    transformed = jax.nn.softplus(x[:, col]) + jax.nn.softplus(var)[0]
    pieces = [x[:, :col], transformed.reshape(-1, 1)]
    if col + 1 < x.shape[1]:
        pieces.append(x[:, col + 1:])
    return jnp.concatenate(pieces, axis=1)


if __name__ == "__main__":
    key = jax.random.PRNGKey(0)
    k1, k2, k3, k4 = jax.random.split(key, 4)

    # Deterministic parameter init matching SplitDim.__init__ (correction=True):
    # var = torch.zeros(1).
    var = jnp.zeros((1,), dtype=jnp.float32)

    # Case 1: lane-dense path, D | 128 (cheap lane & (d-1) mask), f32.
    N, D, col = 8, 32, 1
    x = jax.random.normal(k1, (N, D), dtype=jnp.float32)
    out = jax.block_until_ready(splitdim_forward(x, var, col=col))
    ref = splitdim_reference(x, var, col=col)
    assert out.shape == (N, D)
    assert jnp.allclose(out, ref, atol=1e-5, rtol=1e-5), "lane-dense (pow2) mismatch"

    # Case 1b: same path in bf16 (compute in f32, store bf16).
    x_bf = x.astype(jnp.bfloat16)
    out_bf = jax.block_until_ready(splitdim_forward(x_bf, var, col=col))
    ref_bf = splitdim_reference(x_bf.astype(jnp.float32), var, col=col)
    assert jnp.allclose(out_bf.astype(jnp.float32), ref_bf, atol=2e-2, rtol=2e-2), \
        "lane-dense bf16 mismatch"

    # Case 2: lane-dense general path — D=20 does NOT divide 128 but N*D % 128 == 0,
    # so it still gets unmasked 128-lane stores (flat-index modulo mask).
    N2, D2 = 32, 20
    x2 = jax.random.normal(k2, (N2, D2), dtype=jnp.float32)
    out2 = jax.block_until_ready(splitdim_forward(x2, var, col=3))
    ref2 = splitdim_reference(x2, var, col=3)
    assert jnp.allclose(out2, ref2, atol=1e-5, rtol=1e-5), "lane-dense (flat) mismatch"

    # Case 3: fallback row-tiled path (N*D % 128 != 0).
    N3, D3 = 16, 20
    x3 = jax.random.normal(k3, (N3, D3), dtype=jnp.float32)
    out3 = jax.block_until_ready(splitdim_forward(x3, var, col=3))
    ref3 = splitdim_reference(x3, var, col=3)
    assert jnp.allclose(out3, ref3, atol=1e-5, rtol=1e-5), "fallback path mismatch"

    # Case 4: wide-D donated path — only the 128-lane chunk containing `col`
    # is moved; the rest of x is preserved through the input/output alias.
    N4, D4, col4 = 64, 384, 200
    x4 = jax.random.normal(k4, (N4, D4), dtype=jnp.float32)
    ref4 = jax.block_until_ready(splitdim_reference(x4, var, col=col4))
    run_donated = jax.jit(
        functools.partial(splitdim_forward, col=col4, donate_x=True),
        donate_argnums=(0,),
    )
    out4 = jax.block_until_ready(run_donated(x4, var))   # x4 is donated; not reused
    assert out4.shape == (N4, D4)
    assert jnp.allclose(out4, ref4, atol=1e-5, rtol=1e-5), "donated chunk path mismatch"

    print("KERNEL_OK")
</pallas_src>

<mosaic_0001>
module attributes {stable_mosaic.version = 11 : i64} {
  func.func @_splitdim_lane_dense_kernel(%arg0: i32, %arg1: memref<1xf32, #tpu.memory_space<smem>>, %arg2: memref<2x128xf32, #tpu.memory_space<vmem>>, %arg3: memref<2x128xf32, #tpu.memory_space<vmem>>) attributes {dimension_semantics = [#tpu.dimension_semantics<parallel>], iteration_bounds = array<i64: 1>, scalar_prefetch = 0 : i64, scratch_operands = 0 : i64, tpu.core_type = #tpu.core_type<tc>, window_params = [{transform_indices = @transform_0, window_bounds = array<i64: 1>}, {transform_indices = @transform_1, window_bounds = array<i64: 2, 128>}, {transform_indices = @transform_2, window_bounds = array<i64: 2, 128>}]} {
    %c0 = arith.constant 0 : index
    %c0_0 = arith.constant 0 : index
    %0 = vector.load %arg2[%c0, %c0_0] : memref<2x128xf32, #tpu.memory_space<vmem>>, vector<2x128xf32>
    %c0_1 = arith.constant 0 : index
    %1 = memref.load %arg1[%c0_1] : memref<1xf32, #tpu.memory_space<smem>>
    %cst = arith.constant 0.000000e+00 : f32
    %2 = vector.broadcast %cst : f32 to vector<2x128xf32>
    %3 = arith.maximumf %0, %2 : vector<2x128xf32>
    %4 = math.absf %0 : vector<2x128xf32>
    %cst_2 = arith.constant 0.000000e+00 : f32
    %5 = vector.broadcast %cst_2 : f32 to vector<2x128xf32>
    %6 = arith.subf %5, %4 : vector<2x128xf32>
    %7 = math.exp %6 : vector<2x128xf32>
    %8 = math.log1p %7 : vector<2x128xf32>
    %9 = arith.addf %3, %8 : vector<2x128xf32>
    %10 = vector.broadcast %1 : f32 to vector<2x128xf32>
    %11 = arith.addf %9, %10 : vector<2x128xf32>
    %12 = tpu.iota {dimensions = array<i32: 1>} : vector<1x128xi32>
    %c31_i32 = arith.constant 31 : i32
    %13 = vector.broadcast %c31_i32 : i32 to vector<1x128xi32>
    %14 = arith.andi %12, %13 : vector<1x128xi32>
    %c1_i32 = arith.constant 1 : i32
    %15 = vector.broadcast %c1_i32 : i32 to vector<1x128xi32>
    %16 = arith.cmpi eq, %14, %15 : vector<1x128xi32>
    %17 = vector.shape_cast %16 : vector<1x128xi1> to vector<1x128xi1>
    %18 = vector.broadcast %17 : vector<1x128xi1> to vector<2x128xi1>
    %19 = arith.select %18, %11, %0 : vector<2x128xi1>, vector<2x128xf32>
    %c0_3 = arith.constant 0 : index
    %c0_4 = arith.constant 0 : index
    %20 = vector.load %arg3[%c0_3, %c0_4] : memref<2x128xf32, #tpu.memory_space<vmem>>, vector<2x128xf32>
    tpu.vector_store %arg3[%c0_3, %c0_4], %19 {strides = array<i32>} : memref<2x128xf32, #tpu.memory_space<vmem>>, vector<2x128xf32>,
    return
  }
  func.func @transform_0(%arg0: i32) -> i32 {
    %c0_i32 = arith.constant 0 : i32
    %c0_i32_0 = arith.constant 0 : i32
    return %c0_i32 : i32
  }
  func.func @transform_1(%arg0: i32) -> (i32, i32) {
    %c0_i32 = arith.constant 0 : i32
    %c0_i32_0 = arith.constant 0 : i32
    return %arg0, %c0_i32 : i32, i32
  }
  func.func @transform_2(%arg0: i32) -> (i32, i32) {
    %c0_i32 = arith.constant 0 : i32
    %c0_i32_0 = arith.constant 0 : i32
    return %arg0, %c0_i32 : i32, i32
  }
}

</mosaic_0001>

<llo_original>
// kernel: tpu_custom_call.1
$region0: #{tpu_custom_call.1}
  #allocation0 [shape = 'u32[]', space=smem, size = 0x4, offset = 0x4, fixed_abs, tag = 'smem constant byte address 0x4 - core index']
  #allocation1 [shape = 'u32[144,128]{1,0:T(1,128)}', space=vmem, size = 0x12000, scoped, tag = 'internal scratch']
  #allocation2 [shape = 'f32[1]{0:T(128)S(6)}', space=smem, size = 0x200, scoped, tag = 'scoped memory for tpu_custom_call.1']
  %s0 = inlined_call_operand.<no memory space> [shape: f32[1], index: 0, kind: input, shape index: {}]
  %s1 = inlined_call_operand.vmem [shape: f32[2,128], index: 1, kind: input, shape index: {}]
  %s2 = inlined_call_operand.hbm [shape: f32[2,128], index: 2, kind: output, shape index: {}]
  %s3 = sld [smem:[#allocation0]]
  $region18: #{tpu_custom_call.1} parent=0
    _
  %s5 = ssub.s32 1, %s3
  %s6 = scalar_select 0, %s5, %s3
  %7 = sst [smem:[#allocation2]] %s0
  $region1: #{tpu_custom_call.1} parent=0
    #allocation3 [shape = 'u8[1024]{0}', space=vmem, size = 0x400, scoped, tag = 'output window, operand 0, single buffered']
    #allocation4 [shape = 's32[1]{0}', space=sflag, size = 0x4, scoped, tag = 'scoped memory for tpu_custom_call.1']
    %8 = vsyncpa [#allocation4], 0
    // Predicated region
    $region2: #{tpu_custom_call.1} parent=1 // pred_check
      _
    $region3: #{tpu_custom_call.1} parent=1 // pred_check_branch
      %10 = sbr.rel (0) target = $region5
    $region4: #{tpu_custom_call.1} parent=1 // pred_region
      _
    $region5: #{tpu_custom_call.1} parent=1 // pred_fallthru
      _
    // Predicated region
    $region6: #{tpu_custom_call.1} parent=1 // pred_check
      _
    $region7: #{tpu_custom_call.1} parent=1 // pred_check_branch
      %12 = sbr.rel (0) target = $region9
    $region8: #{tpu_custom_call.1} parent=1 // pred_region
      _
    $region9: #{tpu_custom_call.1} parent=1 // pred_fallthru
      _
    %v13 = vld [vmem:[%s1] sm:$0x3]
    %s14 = sld [smem:[#allocation2]]
    %v15 = vmax.f32 %v13, 0.0
    %v16 = vand.u32 2147483647, %v13
    %v17 = vsub.f32 0.0, %v16
    %v18 = vmul.f32 %v17, 1.442695
    %v19 = vpow.pop %v18
    %v20 = vadd.f32 %v19, 1.0
    %v21 = vlog2.pop %v20
    %v22 = vmul.f32 %v21, 0.6931472
    %v23 = vmul.f32 -0.5, %v19
    %v24 = vadd.f32 %v23, 1.0
    %v25 = vmul.f32 %v24, %v19
    %v26 = vand.u32 2147483647, %v19
    %vm27 = vcmp.lt.f32.partialorder %v26, 0.0004427343
    %v28 = vsel %vm27, %v25, %v22
    %v29 = vadd.f32 %v15, %v28
    %v30 = vstv %s14
    %v31 = vadd.f32 %v29, %v30
    %v32 = vlaneseq
    %v33 = vand.u32 %v32, 127
    %v34 = vand.u32 %v33, 31
    %vm35 = vcmp.eq.s32.totalorder %v34, 1
    %v36 = vsel %vm35, 1, 0
    %vm37 = vcmp.eq.s32.totalorder %v36, 1
    %v38 = vsel %vm37, %v31, %v13
    %39 = vst [vmem:[#allocation3] sm:$0x3] %v38
    // Predicated region
    $region10: #{tpu_custom_call.1} parent=1 // pred_check
      _
    $region11: #{tpu_custom_call.1} parent=1 // pred_check_branch
      %41 = sbr.rel (0) target = $region13
    $region12: #{tpu_custom_call.1} parent=1 // pred_region
      %s43 = ssub.s32 32, 32
      %44 = vsyncadd [#allocation4], %s43
      %s46 = sshll.u32 [#allocation3], 4
      %s47 = int_to_ptr.vmem [resolvable:$true] %s46
      %49 = dma.vmem_to_hbm [thread:$0]  %s47, 32, %s2, [#allocation4]
    $region13: #{tpu_custom_call.1} parent=1 // pred_fallthru
      _
    // Predicated region
    $region14: #{tpu_custom_call.1} parent=1 // pred_check
      _
    $region15: #{tpu_custom_call.1} parent=1 // pred_check_branch
      %51 = sbr.rel (0) target = $region17
    $region16: #{tpu_custom_call.1} parent=1 // pred_region
      %52 = dma.done [#allocation4], 32
    $region17: #{tpu_custom_call.1} parent=1 // pred_fallthru
      _
    %53 = vsyncpa [#allocation4], 1

</llo_original>
